<compile_context>
chip_gen: v5e
topology: v5e:2x2
jax: 0.10.0
libtpu: 0.0.40
codegen_flags: <defaults>
</compile_context>

<pallas_src>
import functools

import jax
import jax.numpy as jnp
from jax import lax
from jax.experimental import pallas as pl
from jax.experimental.pallas import tpu as pltpu


def _round_up(x, m):
    return (x + m - 1) // m * m


def int_layernorm_kernel(x_ref, bias_int_ref, out_sf_ref, inv_sf_ref, out_ref, *,
                         h_actual):
    """Process one (block_rows, Hp) tile of tokens; hidden axis lives on lanes."""
    hp = x_ref.shape[-1]
    inv_sf = inv_sf_ref[0]                           # scalar 1/scaling_factor (SMEM)

    x_int = x_ref[...] * inv_sf                      # == x / scaling_factor
    mean_int = jnp.round(
        jnp.sum(x_int, axis=-1, keepdims=True) / jnp.float32(h_actual))
    y_int = x_int - mean_int

    # shift buffer == 0: 2**shift == 1 drops the scalings, but the floor stays.
    y_shifted = jnp.floor(y_int)

    # Exclude padded lanes from the variance (padded x entries are zero, so
    # y_shifted = floor(-mean_int) there; mask it out of the reduction).
    if hp != h_actual:
        lane = lax.broadcasted_iota(jnp.int32, x_int.shape, 1)
        y_shifted = jnp.where(lane < h_actual, y_shifted, jnp.float32(0.0))
    var_int = jnp.sum(y_shifted * y_shifted, axis=-1, keepdims=True)

    std_int = jnp.floor(jnp.sqrt(var_int))           # * 2**0
    half_factor = jnp.floor(jnp.float32(2.0 ** 31) / std_int) * jnp.float32(0.5)
    y_int = jnp.floor(y_int * half_factor)           # == floor(y_int * factor / 2)

    y_int = y_int + bias_int_ref[...]                # hoisted bias_int, (1, Hp)
    out_ref[...] = (y_int * out_sf_ref[...]).astype(out_ref.dtype)


def int_layernorm(x, weight, bias, scaling_factor, *, block_rows=None,
                  vmem_tile_budget_bytes=24 * 1024 * 1024,
                  vmem_limit_bytes=48 * 1024 * 1024):
    """x: (B, S, H) float; weight/bias: (H,); scaling_factor: scalar.

    Returns (out, out_scaling_factor) matching IntLayerNorm.forward.
    """
    B, S, H = x.shape
    n_rows = B * S
    Hp = _round_up(H, 128)                           # lane-dense output width

    # ---- grid-invariant parameter math, computed once (hoisted out of the kernel)
    weight_f = weight.astype(jnp.float32)
    bias_f = bias.astype(jnp.float32)
    sf_base = jnp.sqrt(jnp.float32(H)) / jnp.float32(2.0 ** 30)
    bias_int = jnp.floor((bias_f / weight_f) / sf_base)        # (H,)
    out_sf = sf_base * weight_f                                # (H,) returned scale
    inv_sf = (jnp.float32(1.0) /
              jnp.asarray(scaling_factor, jnp.float32)).reshape(1)

    # ---- tile sizing: biggest row-block that keeps ~4 resident tiles under budget
    if block_rows is None:
        cap = max(8, vmem_tile_budget_bytes // (4 * Hp * 4))
        block_rows = min(1024, cap, _round_up(n_rows, 8))
        block_rows = max(8, (block_rows // 8) * 8)
    rows_p = _round_up(n_rows, block_rows)

    x2 = x.reshape(n_rows, H).astype(jnp.float32)
    if rows_p != n_rows or Hp != H:
        x2 = jnp.pad(x2, ((0, rows_p - n_rows), (0, Hp - H)))
    bias_int_p = jnp.pad(bias_int, (0, Hp - H)).reshape(1, Hp)
    out_sf_p = jnp.pad(out_sf, (0, Hp - H)).reshape(1, Hp)

    kernel = functools.partial(int_layernorm_kernel, h_actual=H)

    out2 = pl.pallas_call(
        kernel,
        out_shape=jax.ShapeDtypeStruct((rows_p, Hp), jnp.float32),
        grid=(rows_p // block_rows,),
        in_specs=[
            pl.BlockSpec((block_rows, Hp), lambda i: (i, 0)),    # x tiles over tokens
            pl.BlockSpec((1, Hp), lambda i: (0, 0)),             # bias_int (broadcast)
            pl.BlockSpec((1, Hp), lambda i: (0, 0)),             # out_sf   (broadcast)
            pl.BlockSpec(memory_space=pltpu.MemorySpace.SMEM),   # inv scaling factor
        ],
        out_specs=pl.BlockSpec((block_rows, Hp), lambda i: (i, 0)),
        compiler_params=pltpu.CompilerParams(
            dimension_semantics=("parallel",),
            vmem_limit_bytes=vmem_limit_bytes,
        ),
    )(x2, bias_int_p, out_sf_p, inv_sf)

    out = out2[:n_rows, :H].reshape(B, S, H)
    return out, out_sf


def ref_int_layernorm(x, weight, bias, scaling_factor):
    """Pure-JAX reference mirroring the PyTorch forward (shift == 0)."""
    H = x.shape[2]
    dim_sqrt = jnp.sqrt(jnp.float32(H))
    x_int = x / scaling_factor
    mean_int = jnp.round(jnp.mean(x_int, axis=2, keepdims=True))
    y_int = x_int - mean_int
    y_shift = jnp.floor(y_int)                       # floor(y_int / 2**0)
    var_int = jnp.sum(y_shift * y_shift, axis=2, keepdims=True)
    std_int = jnp.floor(jnp.sqrt(var_int))           # * 2**0
    factor = jnp.floor(jnp.float32(2.0 ** 31) / std_int)
    y_int = jnp.floor(y_int * factor / 2.0)
    sf_base = dim_sqrt / jnp.float32(2.0 ** 30)
    bias_int = jnp.floor((bias / weight) / sf_base)
    y_int = y_int + bias_int
    out_sf = sf_base * weight
    return y_int * out_sf, out_sf


def _check(B, S, H, key):
    kx, kw, kb = jax.random.split(key, 3)
    x = jax.random.normal(kx, (B, S, H), dtype=jnp.float32)
    weight = 1.0 + 0.1 * jax.random.normal(kw, (H,), dtype=jnp.float32)
    bias = 0.05 * jax.random.normal(kb, (H,), dtype=jnp.float32)
    scaling_factor = jnp.float32(0.01)

    out, out_sf = int_layernorm(x, weight, bias, scaling_factor)
    out = jax.block_until_ready(out)
    out_sf = jax.block_until_ready(out_sf)

    ref_out, ref_sf = ref_int_layernorm(x, weight, bias, scaling_factor)
    assert out.shape == (B, S, H) and out_sf.shape == (H,)
    assert jnp.allclose(out, ref_out, rtol=1e-3, atol=2e-3)
    assert jnp.allclose(out_sf, ref_sf, rtol=1e-6, atol=1e-9)


if __name__ == "__main__":
    key = jax.random.PRNGKey(0)
    k1, k2 = jax.random.split(key)
    # Small shape consistent with the module (normalizes over hidden = x.shape[2]).
    _check(B=2, S=8, H=32, key=k1)
    # Exercises row padding (B*S not a multiple of the block) and lane padding.
    _check(B=2, S=13, H=96, key=k2)
    print("KERNEL_OK")
</pallas_src>

<mosaic_0001>
module attributes {stable_mosaic.version = 11 : i64} {
  func.func @int_layernorm_kernel(%arg0: i32, %arg1: memref<16x128xf32, #tpu.memory_space<vmem>>, %arg2: memref<1x128xf32, #tpu.memory_space<vmem>>, %arg3: memref<1x128xf32, #tpu.memory_space<vmem>>, %arg4: memref<1xf32, #tpu.memory_space<smem>>, %arg5: memref<16x128xf32, #tpu.memory_space<vmem>>) attributes {dimension_semantics = [#tpu.dimension_semantics<parallel>], iteration_bounds = array<i64: 1>, scalar_prefetch = 0 : i64, scratch_operands = 0 : i64, tpu.core_type = #tpu.core_type<tc>, window_params = [{transform_indices = @transform_0, window_bounds = array<i64: 16, 128>}, {pipeline_mode = #tpu.pipeline_mode<synchronous>, transform_indices = @transform_1, window_bounds = array<i64: 1, 128>}, {pipeline_mode = #tpu.pipeline_mode<synchronous>, transform_indices = @transform_2, window_bounds = array<i64: 1, 128>}, {transform_indices = @transform_3, window_bounds = array<i64: 1>}, {transform_indices = @transform_4, window_bounds = array<i64: 16, 128>}]} {
    %c0 = arith.constant 0 : index
    %0 = memref.load %arg4[%c0] : memref<1xf32, #tpu.memory_space<smem>>
    %c0_0 = arith.constant 0 : index
    %c0_1 = arith.constant 0 : index
    %1 = vector.load %arg1[%c0_0, %c0_1] : memref<16x128xf32, #tpu.memory_space<vmem>>, vector<16x128xf32>
    %2 = vector.broadcast %0 : f32 to vector<16x128xf32>
    %3 = arith.mulf %1, %2 : vector<16x128xf32>
    %cst = arith.constant dense<0.000000e+00> : vector<16xf32>
    %4 = vector.multi_reduction <add>, %3, %cst [1] : vector<16x128xf32> to vector<16xf32>
    %5 = vector.shape_cast %4 : vector<16xf32> to vector<16x1xf32>
    %cst_2 = arith.constant 3.200000e+01 : f32
    %6 = vector.broadcast %cst_2 : f32 to vector<16x1xf32>
    %7 = arith.divf %5, %6 : vector<16x1xf32>
    %8 = math.roundeven %7 : vector<16x1xf32>
    %9 = vector.broadcast %8 : vector<16x1xf32> to vector<16x128xf32>
    %10 = arith.subf %3, %9 : vector<16x128xf32>
    %11 = math.floor %10 : vector<16x128xf32>
    %12 = tpu.iota {dimensions = array<i32: 1>} : vector<16x128xi32>
    %c32_i32 = arith.constant 32 : i32
    %13 = vector.broadcast %c32_i32 : i32 to vector<16x128xi32>
    %14 = arith.cmpi slt, %12, %13 : vector<16x128xi32>
    %cst_3 = arith.constant 0.000000e+00 : f32
    %15 = vector.broadcast %cst_3 : f32 to vector<16x128xf32>
    %16 = arith.select %14, %11, %15 : vector<16x128xi1>, vector<16x128xf32>
    %17 = arith.mulf %16, %16 : vector<16x128xf32>
    %cst_4 = arith.constant dense<0.000000e+00> : vector<16xf32>
    %18 = vector.multi_reduction <add>, %17, %cst_4 [1] : vector<16x128xf32> to vector<16xf32>
    %19 = vector.shape_cast %18 : vector<16xf32> to vector<16x1xf32>
    %20 = math.sqrt %19 : vector<16x1xf32>
    %21 = math.floor %20 : vector<16x1xf32>
    %cst_5 = arith.constant 2.14748365E+9 : f32
    %22 = vector.broadcast %cst_5 : f32 to vector<16x1xf32>
    %23 = arith.divf %22, %21 : vector<16x1xf32>
    %24 = math.floor %23 : vector<16x1xf32>
    %cst_6 = arith.constant 5.000000e-01 : f32
    %25 = vector.broadcast %cst_6 : f32 to vector<16x1xf32>
    %26 = arith.mulf %24, %25 : vector<16x1xf32>
    %27 = vector.broadcast %26 : vector<16x1xf32> to vector<16x128xf32>
    %28 = arith.mulf %10, %27 : vector<16x128xf32>
    %29 = math.floor %28 : vector<16x128xf32>
    %c0_7 = arith.constant 0 : index
    %c0_8 = arith.constant 0 : index
    %30 = vector.load %arg2[%c0_7, %c0_8] : memref<1x128xf32, #tpu.memory_space<vmem>>, vector<1x128xf32>
    %31 = vector.broadcast %30 : vector<1x128xf32> to vector<16x128xf32>
    %32 = arith.addf %29, %31 : vector<16x128xf32>
    %c0_9 = arith.constant 0 : index
    %c0_10 = arith.constant 0 : index
    %33 = vector.load %arg3[%c0_9, %c0_10] : memref<1x128xf32, #tpu.memory_space<vmem>>, vector<1x128xf32>
    %34 = vector.broadcast %33 : vector<1x128xf32> to vector<16x128xf32>
    %35 = arith.mulf %32, %34 : vector<16x128xf32>
    %c0_11 = arith.constant 0 : index
    %c0_12 = arith.constant 0 : index
    %36 = vector.load %arg5[%c0_11, %c0_12] : memref<16x128xf32, #tpu.memory_space<vmem>>, vector<16x128xf32>
    tpu.vector_store %arg5[%c0_11, %c0_12], %35 {strides = array<i32>} : memref<16x128xf32, #tpu.memory_space<vmem>>, vector<16x128xf32>,
    return
  }
  func.func @transform_0(%arg0: i32) -> (i32, i32) {
    %c0_i32 = arith.constant 0 : i32
    %c0_i32_0 = arith.constant 0 : i32
    return %arg0, %c0_i32 : i32, i32
  }
  func.func @transform_1(%arg0: i32) -> (i32, i32) {
    %c0_i32 = arith.constant 0 : i32
    %c0_i32_0 = arith.constant 0 : i32
    %c0_i32_1 = arith.constant 0 : i32
    return %c0_i32, %c0_i32_0 : i32, i32
  }
  func.func @transform_2(%arg0: i32) -> (i32, i32) {
    %c0_i32 = arith.constant 0 : i32
    %c0_i32_0 = arith.constant 0 : i32
    %c0_i32_1 = arith.constant 0 : i32
    return %c0_i32, %c0_i32_0 : i32, i32
  }
  func.func @transform_3(%arg0: i32) -> i32 {
    %c0_i32 = arith.constant 0 : i32
    %c0_i32_0 = arith.constant 0 : i32
    return %c0_i32 : i32
  }
  func.func @transform_4(%arg0: i32) -> (i32, i32) {
    %c0_i32 = arith.constant 0 : i32
    %c0_i32_0 = arith.constant 0 : i32
    return %arg0, %c0_i32 : i32, i32
  }
}

</mosaic_0001>

<llo_original>
// kernel: tpu_custom_call.1
$region0: #{tpu_custom_call.1}
  #allocation0 [shape = 'u32[]', space=smem, size = 0x4, offset = 0x4, fixed_abs, tag = 'smem constant byte address 0x4 - core index']
  #allocation1 [shape = 'u32[72,128]{1,0:T(1,128)}', space=vmem, size = 0x9000, scoped, tag = 'internal scratch']
  #allocation2 [shape = 'f32[1]{0:T(128)S(6)}', space=smem, size = 0x200, scoped, tag = 'scoped memory for tpu_custom_call.1']
  %s0 = inlined_call_operand.hbm [shape: f32[16,128], index: 0, kind: input, shape index: {}]
  %s1 = inlined_call_operand.vmem [shape: f32[1,128], index: 1, kind: input, shape index: {}]
  %s2 = inlined_call_operand.vmem [shape: f32[1,128], index: 2, kind: input, shape index: {}]
  %s3 = inlined_call_operand.<no memory space> [shape: f32[1], index: 3, kind: input, shape index: {}]
  %s4 = inlined_call_operand.hbm [shape: f32[16,128], index: 4, kind: output, shape index: {}]
  %s5 = sld [smem:[#allocation0]]
  $region30: #{tpu_custom_call.1} parent=0
    _
  %s7 = ssub.s32 1, %s5
  %s8 = scalar_select 0, %s7, %s5
  %9 = sst [smem:[#allocation2]] %s3
  $region1: #{tpu_custom_call.1} parent=0
    #allocation3 [shape = 'u8[8192]{0}', space=vmem, size = 0x2000, scoped, tag = 'input window, operand 0, single buffered']
    #allocation4 [shape = 's32[1]{0}', space=sflag, size = 0x4, scoped, tag = 'scoped memory for tpu_custom_call.1']
    #allocation5 [shape = 's32[1]{0}', space=sflag, size = 0x4, scoped, tag = 'scoped memory for tpu_custom_call.1']
    #allocation6 [shape = 'u8[8192]{0}', space=vmem, size = 0x2000, scoped, tag = 'output window, operand 0, single buffered']
    %10 = vsyncpa [#allocation4], 0
    %11 = vsyncpa [#allocation5], 0
    // Predicated region
    $region2: #{tpu_custom_call.1} parent=1 // pred_check
      _
    $region3: #{tpu_custom_call.1} parent=1 // pred_check_branch
      %13 = sbr.rel (0) target = $region5
    $region4: #{tpu_custom_call.1} parent=1 // pred_region
      %15 = vsyncadd [#allocation4], 0
      %s16 = sshll.u32 %s0, 4
      %s17 = int_to_ptr.hbm [resolvable:$true] %s16
      %s18 = sshll.u32 [#allocation3], 4
      %s19 = int_to_ptr.vmem [resolvable:$true] %s18
      %24 = dma.hbm_to_vmem [thread:$0]  %s17, 256, %s19, [#allocation4], 128, 128, 8
    $region5: #{tpu_custom_call.1} parent=1 // pred_fallthru
      _
    // Predicated region
    $region6: #{tpu_custom_call.1} parent=1 // pred_check
      _
    $region7: #{tpu_custom_call.1} parent=1 // pred_check_branch
      %26 = sbr.rel (0) target = $region9
    $region8: #{tpu_custom_call.1} parent=1 // pred_region
      _
    $region9: #{tpu_custom_call.1} parent=1 // pred_fallthru
      _
    // Predicated region
    $region10: #{tpu_custom_call.1} parent=1 // pred_check
      _
    $region11: #{tpu_custom_call.1} parent=1 // pred_check_branch
      %28 = sbr.rel (0) target = $region13
    $region12: #{tpu_custom_call.1} parent=1 // pred_region
      _
    $region13: #{tpu_custom_call.1} parent=1 // pred_fallthru
      _
    // Predicated region
    $region14: #{tpu_custom_call.1} parent=1 // pred_check
      _
    $region15: #{tpu_custom_call.1} parent=1 // pred_check_branch
      %30 = sbr.rel (0) target = $region17
    $region16: #{tpu_custom_call.1} parent=1 // pred_region
      _
    $region17: #{tpu_custom_call.1} parent=1 // pred_fallthru
      _
    // Predicated region
    $region18: #{tpu_custom_call.1} parent=1 // pred_check
      _
    $region19: #{tpu_custom_call.1} parent=1 // pred_check_branch
      %32 = sbr.rel (0) target = $region21
    $region20: #{tpu_custom_call.1} parent=1 // pred_region
      %34 = dma.done [#allocation4], 256
    $region21: #{tpu_custom_call.1} parent=1 // pred_fallthru
      _
    %s35 = sld [smem:[#allocation2]]
    %v36 = vld [vmem:[#allocation3] sm:$0xff]
    %v37 = vld [vmem:[#allocation3 + $0x8] sm:$0xff]
    %v38 = vstv %s35
    %v39 = vmul.f32 %v36, %v38
    %v40 = vmul.f32 %v37, %v38
    %41 = vadd.xlane.f32.xlu0 %v39
    %v42 = vpop.xlane.xlu0 %41
    %43 = vadd.xlane.f32.xlu0 %v40
    %v44 = vpop.xlane.xlu0 %43
    %v45 = vrcp.pop 32.0
    %v46 = vmul.f32 32.0, %v45
    %v47 = vsub.f32 1.0, %v46
    %v48 = vmul.f32 %v45, %v47
    %v49 = vadd.f32 %v45, %v48
    %vm50 = vweird.f32 %v45
    %v51 = vsel %vm50, %v45, %v49
    %v52 = vmul.f32 %v42, %v51
    %v53 = vmul.f32 %v44, %v51
    %v54 = vround.ne.pseudo %v52
    %v55 = vround.ne.pseudo %v53
    %v56 = vsub.f32 %v39, %v54
    %v57 = vsub.f32 %v40, %v55
    %v58 = vfloor.f32 %v56
    %v59 = vfloor.f32 %v57
    %v60 = vlaneseq
    %v61 = vand.u32 %v60, 127
    %vm62 = vcmp.lt.s32.totalorder %v61, 32
    %v63 = vsel %vm62, %v58, 0.0
    %v64 = vsel %vm62, %v59, 0.0
    %v65 = vmul.f32 %v63, %v63
    %v66 = vmul.f32 %v64, %v64
    %67 = vadd.xlane.f32.xlu0 %v65
    %v68 = vpop.xlane.xlu0 %67
    %69 = vadd.xlane.f32.xlu0 %v66
    %v70 = vpop.xlane.xlu0 %69
    %v71 = vrsqrt.pop %v68
    %v72 = vmul.f32 %v71, %v68
    %v73 = vmul.f32 %v72, %v71
    %v74 = vmul.f32 0.5, %v73
    %v75 = vsub.f32 1.5, %v74
    %v76 = vmul.f32 %v71, %v75
    %v77 = vmul.f32 %v68, %v76
    %vm78 = vcmp.eq.f32.partialorder %v68, inf
    %v79 = vsel %vm78, %v68, %v77
    %vm80 = vcmp.eq.f32.partialorder %v68, 0.0
    %v81 = vand.u32 %v68, 2147483648
    %v82 = vsel %vm80, %v81, %v79
    %v83 = vrsqrt.pop %v70
    %v84 = vmul.f32 %v83, %v70
    %v85 = vmul.f32 %v84, %v83
    %v86 = vmul.f32 0.5, %v85
    %v87 = vsub.f32 1.5, %v86
    %v88 = vmul.f32 %v83, %v87
    %v89 = vmul.f32 %v70, %v88
    %vm90 = vcmp.eq.f32.partialorder %v70, inf
    %v91 = vsel %vm90, %v70, %v89
    %vm92 = vcmp.eq.f32.partialorder %v70, 0.0
    %v93 = vand.u32 %v70, 2147483648
    %v94 = vsel %vm92, %v93, %v91
    %v95 = vfloor.f32 %v82
    %v96 = vfloor.f32 %v94
    %v97 = vrcp.pop %v95
    %v98 = vmul.f32 %v95, %v97
    %v99 = vsub.f32 1.0, %v98
    %v100 = vmul.f32 %v97, %v99
    %v101 = vadd.f32 %v97, %v100
    %vm102 = vweird.f32 %v95
    %vm103 = vweird.f32 %v97
    %vm104 = vmor %vm102, %vm103
    %v105 = vsel %vm104, %v97, %v101
    %v106 = vand.u32 2147483647, %v95
    %vm107 = vcmp.eq.f32.partialorder %v106, 8.507059e+37
    %v108 = vand.u32 %v95, 2147483648
    %v109 = vor.u32 1.1754944e-38, %v108
    %v110 = vsel %vm107, %v109, %v105
    %v111 = vmul.f32 2.1474836e+09, %v110
    %v112 = vrcp.pop %v96
    %v113 = vmul.f32 %v96, %v112
    %v114 = vsub.f32 1.0, %v113
    %v115 = vmul.f32 %v112, %v114
    %v116 = vadd.f32 %v112, %v115
    %vm117 = vweird.f32 %v96
    %vm118 = vweird.f32 %v112
    %vm119 = vmor %vm117, %vm118
    %v120 = vsel %vm119, %v112, %v116
    %v121 = vand.u32 2147483647, %v96
    %vm122 = vcmp.eq.f32.partialorder %v121, 8.507059e+37
    %v123 = vand.u32 %v96, 2147483648
    %v124 = vor.u32 1.1754944e-38, %v123
    %v125 = vsel %vm122, %v124, %v120
    %v126 = vmul.f32 2.1474836e+09, %v125
    %v127 = vfloor.f32 %v111
    %v128 = vfloor.f32 %v126
    %v129 = vmul.f32 %v127, 0.5
    %v130 = vmul.f32 %v128, 0.5
    %v131 = vmul.f32 %v56, %v129
    %v132 = vmul.f32 %v57, %v130
    %v133 = vfloor.f32 %v131
    %v134 = vfloor.f32 %v132
    %v135 = vld [vmem:[%s1] sm:$0x1]
    %v137 = vperm.slane %v135, 0
    %v139 = vadd.f32 %v133, %v137
    %v140 = vadd.f32 %v134, %v137
    %v141 = vld [vmem:[%s2] sm:$0x1]
    %v143 = vperm.slane %v141, 0
    %v145 = vmul.f32 %v139, %v143
    %v146 = vmul.f32 %v140, %v143
    %147 = vst [vmem:[#allocation6] sm:$0xff] %v145
    %148 = vst [vmem:[#allocation6 + $0x8] sm:$0xff] %v146
    // Predicated region
    $region22: #{tpu_custom_call.1} parent=1 // pred_check
      _
    $region23: #{tpu_custom_call.1} parent=1 // pred_check_branch
      %150 = sbr.rel (0) target = $region25
    $region24: #{tpu_custom_call.1} parent=1 // pred_region
      %152 = vsyncadd [#allocation5], 0
      %s153 = sshll.u32 [#allocation6], 4
      %s154 = int_to_ptr.vmem [resolvable:$true] %s153
      %s155 = sshll.u32 %s4, 4
      %s156 = int_to_ptr.hbm [resolvable:$true] %s155
      %161 = dma.vmem_to_hbm [thread:$0]  %s154, 256, %s156, [#allocation5], 128, 128, 8
    $region25: #{tpu_custom_call.1} parent=1 // pred_fallthru
      _
    // Predicated region
    $region26: #{tpu_custom_call.1} parent=1 // pred_check
      _
    $region27: #{tpu_custom_call.1} parent=1 // pred_check_branch
      %163 = sbr.rel (0) target = $region29
    $region28: #{tpu_custom_call.1} parent=1 // pred_region
      %165 = dma.done [#allocation5], 256
    $region29: #{tpu_custom_call.1} parent=1 // pred_fallthru
      _
    %166 = vsyncpa [#allocation4], 1
    %167 = vsyncpa [#allocation5], 1

</llo_original>
